<compile_context>
chip_gen: v6e
topology: v6e:2x2x1
jax: 0.10.0
libtpu: 0.0.40
codegen_flags: <defaults>
</compile_context>

<pallas_src>
import functools

import jax
import jax.numpy as jnp
from jax.experimental import pallas as pl
from jax.experimental.pallas import tpu as pltpu


def _round_up(a, b):
    return (a + b - 1) // b * b


def _fused_linear_kernel(x_ref, w_ref, b_ref, o_ref):
    # x_ref: (tm, lane)  packed token rows (lane = pack * d_pad, lane-dense)
    # w_ref: (lane, lane) block-diagonal fused weight, resident in VMEM
    # b_ref: (1, lane)    lane-tiled fused bias (f32)
    out = jnp.dot(x_ref[...], w_ref[...], preferred_element_type=jnp.float32)
    o_ref[...] = (out + b_ref[...]).astype(o_ref.dtype)


@functools.partial(jax.jit, static_argnames=("tm_rows",))
def single_conv2d_forward(x, w_in, b_in, w_out, b_out, *, tm_rows=4096):
    """Forward of SingleConv2d.

    x: (B, P, D). w_in: (INNER, D), b_in: (INNER,), w_out: (D, INNER),
    b_out: (D,)  (nn.Linear layout: weight is (out_features, in_features)).
    """
    b, p, d = x.shape
    m = b * p
    itemsize = jnp.dtype(x.dtype).itemsize

    # --- Fuse the two linears (no activation in between). --------------------
    # out = (x @ W_in^T + b_in) @ W_out^T + b_out
    #     =  x @ (W_in^T @ W_out^T) + (b_in @ W_out^T + b_out)
    w_fused = jnp.dot(w_in.T, w_out.T, preferred_element_type=jnp.float32)      # (d, d)
    b_fused = jnp.dot(b_in, w_out.T, preferred_element_type=jnp.float32) + b_out  # (d,)
    w_fused = w_fused.astype(x.dtype)
    b_fused = b_fused.astype(jnp.float32)

    # --- Lane-dense packing: pad d -> d_pad, pack tokens to 128-wide rows. ----
    if d <= 128:
        d_pad = 1
        while d_pad < d:          # divisors of 128 are the powers of two <= 128
            d_pad *= 2
        pack = 128 // d_pad
    else:
        d_pad = _round_up(d, 128)
        pack = 1
    lane = pack * d_pad

    if d_pad != d:
        w_fused = jnp.pad(w_fused, ((0, d_pad - d), (0, d_pad - d)))
        b_fused = jnp.pad(b_fused, ((0, d_pad - d),))

    # Block-diagonal weight (pack copies of w_fused) and lane-tiled bias.
    w_block = jnp.kron(jnp.eye(pack, dtype=w_fused.dtype), w_fused)   # (lane, lane)
    b_block = jnp.tile(b_fused, pack).reshape(1, lane)                # (1, lane)

    # --- Pad tokens only to pack*8 granularity (sublane-aligned packing). -----
    m_padded = _round_up(m, pack * 8)
    x2 = x.reshape(m, d)
    if d_pad != d:
        x2 = jnp.pad(x2, ((0, 0), (0, d_pad - d)))
    if m_padded != m:
        x2 = jnp.pad(x2, ((0, m_padded - m), (0, 0)))
    rows = m_padded // pack                              # multiple of 8
    x_packed = x2.reshape(rows, lane)                    # zero-copy row-major

    # --- Tile selection. -------------------------------------------------------
    tm = min(tm_rows, rows)
    # Bound the double-buffered working set (2*(in+out) tiles) to ~16 MiB.
    max_tm = max(8, (4 * 1024 * 1024 // (lane * itemsize)) // 8 * 8)
    tm = min(tm, max_tm)
    # v7x megacore: keep the grid at >= 2 steps whenever the input allows so
    # both TensorCores get work (harmless on single-TC v5e/v6e).
    if rows > 8:
        tm = min(tm, max(_round_up(pl.cdiv(rows, 2), 8), 8))
    tm = max(tm, 8)
    grid = (pl.cdiv(rows, tm),)                          # ragged last block OK

    # Right-sized VMEM limit: double-buffered in+out tiles + resident weight/bias.
    tile_bytes = tm * lane * itemsize
    vmem_limit = (2 * 2 * tile_bytes
                  + 2 * lane * lane * itemsize
                  + 4 * lane * 4
                  + (2 << 20))                            # headroom
    vmem_limit = max(vmem_limit, 4 * 1024 * 1024)

    cost = pl.CostEstimate(
        flops=2 * rows * lane * lane,
        transcendentals=0,
        bytes_accessed=2 * rows * lane * itemsize + lane * lane * itemsize + lane * 4,
    )

    out_packed = pl.pallas_call(
        _fused_linear_kernel,
        out_shape=jax.ShapeDtypeStruct((rows, lane), x.dtype),
        grid_spec=pltpu.PrefetchScalarGridSpec(
            num_scalar_prefetch=0,
            grid=grid,
            in_specs=[
                pl.BlockSpec((tm, lane), lambda i: (i, 0)),     # packed token rows
                pl.BlockSpec((lane, lane), lambda i: (0, 0)),   # fused weight (resident)
                pl.BlockSpec((1, lane), lambda i: (0, 0)),      # fused bias (resident)
            ],
            out_specs=pl.BlockSpec((tm, lane), lambda i: (i, 0)),
        ),
        compiler_params=pltpu.CompilerParams(
            dimension_semantics=("parallel",),
            vmem_limit_bytes=int(vmem_limit),
        ),
        cost_estimate=cost,
    )(x_packed, w_block, b_block)

    out2 = out_packed.reshape(m_padded, d_pad)
    if m_padded != m or d_pad != d:
        out2 = out2[:m, :d]
    return out2.reshape(b, p, d)


def _reference(x, w_in, b_in, w_out, b_out):
    h = jnp.einsum("bpd,id->bpi", x, w_in) + b_in
    return jnp.einsum("bpi,di->bpd", h, w_out) + b_out


if __name__ == "__main__":
    key = jax.random.PRNGKey(0)
    B, P, D, INNER = 2, 64, 16, 32   # (batch, pix_num, channel, inner_dim)

    k_x, k_wi, k_bi, k_wo, k_bo = jax.random.split(key, 5)
    x = jax.random.normal(k_x, (B, P, D), dtype=jnp.float32)
    # nn.Linear layout: weight (out_features, in_features), bias (out_features,)
    w_in = jax.random.normal(k_wi, (INNER, D), dtype=jnp.float32) * 0.1
    b_in = jax.random.normal(k_bi, (INNER,), dtype=jnp.float32) * 0.1
    w_out = jax.random.normal(k_wo, (D, INNER), dtype=jnp.float32) * 0.1
    b_out = jax.random.normal(k_bo, (D,), dtype=jnp.float32) * 0.1

    out = single_conv2d_forward(x, w_in, b_in, w_out, b_out)
    out = jax.block_until_ready(out)

    ref = _reference(x, w_in, b_in, w_out, b_out)
    assert out.shape == (B, P, D)
    # Fusing the two linears changes rounding order slightly; fp32 stays well
    # within this tolerance.
    assert jnp.allclose(out, ref, atol=1e-4, rtol=1e-4), "mismatch vs reference"

    # Also exercise the ragged-tail path (token count not a multiple of pack*8).
    x_odd = jax.random.normal(k_x, (1, 37, D), dtype=jnp.float32)
    out_odd = jax.block_until_ready(single_conv2d_forward(x_odd, w_in, b_in, w_out, b_out))
    ref_odd = _reference(x_odd, w_in, b_in, w_out, b_out)
    assert jnp.allclose(out_odd, ref_odd, atol=1e-4, rtol=1e-4), "ragged-tail mismatch"

    print("KERNEL_OK")
</pallas_src>

<mosaic_0001>
module attributes {stable_mosaic.version = 11 : i64} {
  func.func @_fused_linear_kernel(%arg0: i32, %arg1: memref<8x128xf32, #tpu.memory_space<vmem>>, %arg2: memref<128x128xf32, #tpu.memory_space<vmem>>, %arg3: memref<1x128xf32, #tpu.memory_space<vmem>>, %arg4: memref<8x128xf32, #tpu.memory_space<vmem>>) attributes {dimension_semantics = [#tpu.dimension_semantics<parallel>], iteration_bounds = array<i64: 2>, scalar_prefetch = 0 : i64, scratch_operands = 0 : i64, tpu.core_type = #tpu.core_type<tc>, window_params = [{transform_indices = @transform_0, window_bounds = array<i64: 8, 128>}, {pipeline_mode = #tpu.pipeline_mode<synchronous>, transform_indices = @transform_1, window_bounds = array<i64: 128, 128>}, {pipeline_mode = #tpu.pipeline_mode<synchronous>, transform_indices = @transform_2, window_bounds = array<i64: 1, 128>}, {transform_indices = @transform_3, window_bounds = array<i64: 8, 128>}]} {
    %c0 = arith.constant 0 : index
    %c0_0 = arith.constant 0 : index
    %0 = vector.load %arg1[%c0, %c0_0] : memref<8x128xf32, #tpu.memory_space<vmem>>, vector<8x128xf32>
    %c0_1 = arith.constant 0 : index
    %c0_2 = arith.constant 0 : index
    %1 = vector.load %arg2[%c0_1, %c0_2] : memref<128x128xf32, #tpu.memory_space<vmem>>, vector<128x128xf32>
    %cst = arith.constant dense<0.000000e+00> : vector<8x128xf32>
    %2 = tpu.matmul %0, %1, %cst {dimension_numbers = #tpu.dot_dimension_numbers<[1], [0], [0], [1], [0, 0, 1, 1], [], []>} : vector<8x128xf32>, vector<128x128xf32>, vector<8x128xf32> -> vector<8x128xf32>
    %c0_3 = arith.constant 0 : index
    %c0_4 = arith.constant 0 : index
    %3 = vector.load %arg3[%c0_3, %c0_4] : memref<1x128xf32, #tpu.memory_space<vmem>>, vector<1x128xf32>
    %4 = vector.broadcast %3 : vector<1x128xf32> to vector<8x128xf32>
    %5 = arith.addf %2, %4 : vector<8x128xf32>
    %c0_5 = arith.constant 0 : index
    %c0_6 = arith.constant 0 : index
    %6 = vector.load %arg4[%c0_5, %c0_6] : memref<8x128xf32, #tpu.memory_space<vmem>>, vector<8x128xf32>
    tpu.vector_store %arg4[%c0_5, %c0_6], %5 {strides = array<i32>} : memref<8x128xf32, #tpu.memory_space<vmem>>, vector<8x128xf32>,
    return
  }
  func.func @transform_0(%arg0: i32) -> (i32, i32) {
    %c0_i32 = arith.constant 0 : i32
    %c0_i32_0 = arith.constant 0 : i32
    return %arg0, %c0_i32 : i32, i32
  }
  func.func @transform_1(%arg0: i32) -> (i32, i32) {
    %c0_i32 = arith.constant 0 : i32
    %c0_i32_0 = arith.constant 0 : i32
    %c0_i32_1 = arith.constant 0 : i32
    return %c0_i32, %c0_i32_0 : i32, i32
  }
  func.func @transform_2(%arg0: i32) -> (i32, i32) {
    %c0_i32 = arith.constant 0 : i32
    %c0_i32_0 = arith.constant 0 : i32
    %c0_i32_1 = arith.constant 0 : i32
    return %c0_i32, %c0_i32_0 : i32, i32
  }
  func.func @transform_3(%arg0: i32) -> (i32, i32) {
    %c0_i32 = arith.constant 0 : i32
    %c0_i32_0 = arith.constant 0 : i32
    return %arg0, %c0_i32 : i32, i32
  }
}

</mosaic_0001>

<llo_original>
// kernel: tile.8
$region0: #{tile.8}
  #allocation0 [shape = 's32[1]{0}', space=sflag, size = 0x4, scoped, tag = 'scoped memory for tile.8']
  %s0 = inlined_call_operand.vmem [shape: f32[16], index: 0, kind: input, shape index: {}]
  %s1 = inlined_call_operand.vmem [shape: f32[8,16], index: 1, kind: output, shape index: {}]
  // Predicated region
  $region2: #{tile.8} parent=0 // pred_check
    _
  $region3: #{tile.8} parent=0 // pred_check_branch
    %3 = sbr.rel (0) target = $region5
  $region4: #{tile.8} parent=0 // pred_region
    _
  $region5: #{tile.8} parent=0 // pred_fallthru
    _
  %v4 = vld [vmem:[%s0] ss:$0 sm:$0xff]
  %5 = vst [vmem:[%s1] sm:$0xff] %v4

// kernel: tile.9
$region0: #{tile.9}
  %s0 = inlined_call_operand.vmem [shape: f32[8,16], index: 0, kind: input, shape index: {}]
  %s1 = inlined_call_operand.vmem [shape: f32[1,128], index: 1, kind: output, shape index: {}]
  $region1: #{tile.9} parent=0
    #allocation0 [shape = 'u8[4096]{0}', space=vmem, size = 0x1000, scoped, tag = 'scoped mem for output reshape']
    %v2 = vld [vmem:[%s0] sm:$0x1]
    %vm3 = vcmask 130048
    %4 = vst.msk [vmem:[#allocation0] sm:$0x1] %vm3, %v2
    %s5 = scalar_lea.vmem %s0, 7
    %v6 = vld [vmem:[%s5] sm:$0x1]
    %7 = vrot.lane.b32.xlu0 %v6, 112
    %v8 = vpop.permute.xlu0 %7
    %vm9 = vcmask 1048448
    %10 = vst.msk [vmem:[#allocation0] sm:$0x1] %vm9, %v8
    %s11 = scalar_lea.vmem %s0, 6
    %v12 = vld [vmem:[%s11] sm:$0x1]
    %13 = vrot.lane.b32.xlu0 %v12, 96
    %v14 = vpop.permute.xlu0 %13
    %vm15 = vcmask 917248
    %16 = vst.msk [vmem:[#allocation0] sm:$0x1] %vm15, %v14
    %s17 = scalar_lea.vmem %s0, 5
    %v18 = vld [vmem:[%s17] sm:$0x1]
    %19 = vrot.lane.b32.xlu0 %v18, 80
    %v20 = vpop.permute.xlu0 %19
    %vm21 = vcmask 786048
    %22 = vst.msk [vmem:[#allocation0] sm:$0x1] %vm21, %v20
    %s23 = scalar_lea.vmem %s0, 4
    %v24 = vld [vmem:[%s23] sm:$0x1]
    %25 = vrot.lane.b32.xlu0 %v24, 64
    %v26 = vpop.permute.xlu0 %25
    %vm27 = vcmask 654848
    %28 = vst.msk [vmem:[#allocation0] sm:$0x1] %vm27, %v26
    %s29 = scalar_lea.vmem %s0, 3
    %v30 = vld [vmem:[%s29] sm:$0x1]
    %31 = vrot.lane.b32.xlu0 %v30, 48
    %v32 = vpop.permute.xlu0 %31
    %vm33 = vcmask 523648
    %34 = vst.msk [vmem:[#allocation0] sm:$0x1] %vm33, %v32
    %s35 = scalar_lea.vmem %s0, 2
    %v36 = vld [vmem:[%s35] sm:$0x1]
    %37 = vrot.lane.b32.xlu0 %v36, 32
    %v38 = vpop.permute.xlu0 %37
    %vm39 = vcmask 392448
    %40 = vst.msk [vmem:[#allocation0] sm:$0x1] %vm39, %v38
    %s41 = scalar_lea.vmem %s0, 1
    %v42 = vld [vmem:[%s41] sm:$0x1]
    %43 = vrot.lane.b32.xlu0 %v42, 16
    %v44 = vpop.permute.xlu0 %43
    %vm45 = vcmask 261248
    %46 = vst.msk [vmem:[#allocation0] sm:$0x1] %vm45, %v44
    %s48 = sshll.u32 1, 1
    %s49 = ssub.s32 %s48, 1
    %v51 = vld [vmem:[#allocation0] sm:%s49]
    %s52 = sshll.u32 1, 1
    %s53 = ssub.s32 %s52, 1
    %54 = vst [vmem:[%s1] sm:%s53] %v51

// kernel: single_conv2d_forward.1
$region0: #{single_conv2d_forward.1}
  #allocation0 [shape = 'u32[]', space=smem, size = 0x4, offset = 0x4, fixed_abs, tag = 'smem constant byte address 0x4 - core index']
  #allocation1 [shape = 'u32[144,128]{1,0:T(1,128)}', space=vmem, size = 0x12000, scoped, tag = 'internal scratch']
  %s0 = inlined_call_operand.vmem [shape: f32[16,128], index: 0, kind: input, shape index: {}]
  %s1 = inlined_call_operand.vmem [shape: f32[128,128], index: 1, kind: input, shape index: {}]
  %s2 = inlined_call_operand.vmem [shape: f32[1,128], index: 2, kind: input, shape index: {}]
  %s3 = inlined_call_operand.vmem [shape: f32[16,128], index: 3, kind: output, shape index: {}]
  %s4 = sld [smem:[#allocation0]]
  $region45: #{single_conv2d_forward.1} parent=0
    _
  %s6 = ssub.s32 1, %s4
  %s7 = scalar_select 0, %s6, %s4
  loop: start=0, step=1, limit=4
  $region2: #{single_conv2d_forward.1} parent=0 // loop_pre_header
    _
  $region3: #{single_conv2d_forward.1} parent=0 // loop_header
    %s9 = sphi 0, %s13
    %p10 = scmp.ge.s32.totalorder %s9, 4
    %s19 = sphi 0, %s21
    %s22 = sphi 0, %s19
    %s23 = sphi 0, %s22
    %s39 = sphi 0, %s23
    %s43 = sphi 0, %s43
    %s45 = sphi 0, %s43
    %s46 = sphi 0, %s45
    %s60 = sphi 0, %s46
    %s64 = sphi 0, %s64
    %s66 = sphi 0, %s64
    %s67 = sphi 0, %s66
    %s81 = sphi 0, %s67
    %s87 = sphi 0, %s89
    %s90 = sphi 0, %s87
    %s91 = sphi 0, %s90
    %s107 = sphi 0, %s91
  $region4: #{single_conv2d_forward.1} parent=0 // loop_header_branch
    %12 = sbr.rel (%p10) target = $region8
  $region5: #{single_conv2d_forward.1} parent=0 // loop_body
    %s14 = ssub.s32 %s9, 1
    %s15 = ssub.s32 %s9, 2
    %s16 = sadd.s32 %s9, 1
    %s17 = ssub.s32 %s9, %s16
    %p18 = scmp.eq.s32.totalorder %s17, 0
    %s20 = sadd.s32 %s19, 1
    %s21 = scalar_select %p18, %s19, %s20
    %p24 = pneg %p18
    %p25 = scmp.eq.s32.totalorder %s9, 1
    %p26 = por %p24, %p25
    %p27 = scmp.ne.s32.totalorder %s19, %s22
    %p28 = scmp.eq.s32.totalorder %s9, 0
    %p29 = por %p27, %p28
    %p30 = scmp.ne.s32.totalorder %s19, %s22
    %p31 = scmp.eq.s32.totalorder %s14, 1
    %p32 = por %p30, %p31
    %p33 = scmp.ne.s32.totalorder %s22, %s23
    %p34 = scmp.eq.s32.totalorder %s14, 0
    %p35 = por %p33, %p34
    %p36 = scmp.ne.s32.totalorder %s22, %s23
    %p37 = scmp.eq.s32.totalorder %s15, 1
    %p38 = por %p36, %p37
    %p40 = scmp.ne.s32.totalorder %s23, %s39
    %p41 = scmp.eq.s32.totalorder %s15, 0
    %p42 = por %p40, %p41
    %s44 = sadd.s32 %s43, 1
    %p47 = scmp.eq.s32.totalorder %s9, 1
    %p48 = scmp.ne.s32.totalorder %s43, %s45
    %p49 = scmp.eq.s32.totalorder %s9, 0
    %p50 = por %p48, %p49
    %p51 = scmp.ne.s32.totalorder %s43, %s45
    %p52 = scmp.eq.s32.totalorder %s14, 1
    %p53 = por %p51, %p52
    %p54 = scmp.ne.s32.totalorder %s45, %s46
    %p55 = scmp.eq.s32.totalorder %s14, 0
    %p56 = por %p54, %p55
    %p57 = scmp.ne.s32.totalorder %s45, %s46
    %p58 = scmp.eq.s32.totalorder %s15, 1
    %p59 = por %p57, %p58
    %p61 = scmp.ne.s32.totalorder %s46, %s60
    %p62 = scmp.eq.s32.totalorder %s15, 0
    %p63 = por %p61, %p62
    %s65 = sadd.s32 %s64, 1
    %p68 = scmp.eq.s32.totalorder %s9, 1
    %p69 = scmp.ne.s32.totalorder %s64, %s66
    %p70 = scmp.eq.s32.totalorder %s9, 0
    %p71 = por %p69, %p70
    %p72 = scmp.ne.s32.totalorder %s64, %s66
    %p73 = scmp.eq.s32.totalorder %s14, 1
    %p74 = por %p72, %p73
    %p75 = scmp.ne.s32.totalorder %s66, %s67
    %p76 = scmp.eq.s32.totalorder %s14, 0
    %p77 = por %p75, %p76
    %p78 = scmp.ne.s32.totalorder %s66, %s67
    %p79 = scmp.eq.s32.totalorder %s15, 1
    %p80 = por %p78, %p79
    %p82 = scmp.ne.s32.totalorder %s67, %s81
    %p83 = scmp.eq.s32.totalorder %s15, 0
    %p84 = por %p82, %p83
    %s85 = ssub.s32 %s9, %s16
    %p86 = scmp.eq.s32.totalorder %s85, 0
    %s88 = sadd.s32 %s87, 1
    %s89 = scalar_select %p86, %s87, %s88
    %p92 = pneg %p86
    %p93 = scmp.eq.s32.totalorder %s9, 1
    %p94 = por %p92, %p93
    %p95 = scmp.ne.s32.totalorder %s87, %s90
    %p96 = scmp.eq.s32.totalorder %s9, 0
    %p97 = por %p95, %p96
    %p98 = scmp.ne.s32.totalorder %s87, %s90
    %p99 = scmp.eq.s32.totalorder %s14, 1
    %p100 = por %p98, %p99
    %p101 = scmp.ne.s32.totalorder %s90, %s91
    %p102 = scmp.eq.s32.totalorder %s14, 0
    %p103 = por %p101, %p102
    %p104 = scmp.ne.s32.totalorder %s90, %s91
    %p105 = scmp.eq.s32.totalorder %s15, 1
    %p106 = por %p104, %p105
    %p108 = scmp.ne.s32.totalorder %s91, %s107
    %p109 = scmp.eq.s32.totalorder %s15, 0
    %p110 = por %p108, %p109
    %p111 = scmp.le.s32.totalorder 1, %s9
    %p112 = scmp.lt.s32.totalorder %s9, 3
    %p113 = pnand %p111, %p112
    %p114 = pneg %p113
    // Predicated region
    $region9: #{single_conv2d_forward.1} parent=5 // pred_check
      _
    $region10: #{single_conv2d_forward.1} parent=5 // pred_check_branch
      %116 = sbr.rel (%p113) target = $region12
    $region11: #{single_conv2d_forward.1} parent=5 // pred_region
      %s117 = ssub.s32 %s9, 1
      // Predicated region
      $region13: #{single_conv2d_forward.1} parent=11 // pred_check
        %p118 = pneg %p56
      $region14: #{single_conv2d_forward.1} parent=11 // pred_check_branch
        %120 = sbr.rel (%p118) target = $region16
      $region15: #{single_conv2d_forward.1} parent=11 // pred_region
        _
      $region16: #{single_conv2d_forward.1} parent=11 // pred_fallthru
        _
      // Predicated region
      $region17: #{single_conv2d_forward.1} parent=11 // pred_check
        %p121 = pneg %p77
      $region18: #{single_conv2d_forward.1} parent=11 // pred_check_branch
        %123 = sbr.rel (%p121) target = $region20
      $region19: #{single_conv2d_forward.1} parent=11 // pred_region
        _
      $region20: #{single_conv2d_forward.1} parent=11 // pred_fallthru
        _
    $region12: #{single_conv2d_forward.1} parent=5 // pred_fallthru
      _
    %p124 = scmp.lt.s32.totalorder %s9, 2
    // Predicated region
    $region21: #{single_conv2d_forward.1} parent=5 // pred_check
      %p125 = pneg %p124
    $region22: #{single_conv2d_forward.1} parent=5 // pred_check_branch
      %127 = sbr.rel (%p125) target = $region24
    $region23: #{single_conv2d_forward.1} parent=5 // pred_region
      // Predicated region
      $region25: #{single_conv2d_forward.1} parent=23 // pred_check
        %p128 = pneg %p29
      $region26: #{single_conv2d_forward.1} parent=23 // pred_check_branch
        %130 = sbr.rel (%p128) target = $region28
      $region27: #{single_conv2d_forward.1} parent=23 // pred_region
        %p131 = scmp.lt.s32.totalorder %s9, 1
        %s132 = scalar_select %p131, %s9, 1
        %s133 = smul.addr %s132, 8
        %s134 = scalar_lea.vmem %s0, %s133
      $region28: #{single_conv2d_forward.1} parent=23 // pred_fallthru
        _
    $region24: #{single_conv2d_forward.1} parent=5 // pred_fallthru
      _
    %p135 = scmp.le.s32.totalorder 1, %s9
    %p136 = scmp.lt.s32.totalorder %s9, 3
    %p137 = pnand %p135, %p136
    %p138 = pneg %p137
    // Predicated region
    $region29: #{single_conv2d_forward.1} parent=5 // pred_check
      _
    $region30: #{single_conv2d_forward.1} parent=5 // pred_check_branch
      %140 = sbr.rel (%p137) target = $region32
    $region31: #{single_conv2d_forward.1} parent=5 // pred_region
      %s141 = ssub.s32 %s9, 1
      %p142 = scmp.lt.s32.totalorder %s14, 1
      %s143 = scalar_select %p142, %s14, 1
      %s144 = smul.addr %s143, 8
      %s145 = scalar_lea.vmem %s0, %s144
      %p146 = pneg %p35
      %p147 = pneg %p32
      %p148 = pneg %p56
      %p149 = pneg %p53
      %p150 = pneg %p77
      %p151 = pneg %p74
      %p152 = pneg %p103
      %p153 = pneg %p100
      %p154 = scmp.lt.s32.totalorder %s14, 1
      %s155 = scalar_select %p154, %s14, 1
      %s156 = smul.addr %s155, 8
      %s157 = scalar_lea.vmem %s3, %s156
      %p158 = scmp.lt.s32.totalorder %s14, 1
      %s159 = scalar_select %p158, %s14, 1
      %s160 = smul.addr %s159, 8
      %s161 = scalar_lea.vmem %s0, %s160
      %p162 = scmp.lt.s32.totalorder %s14, 1
      %s163 = scalar_select %p162, %s14, 1
      %s164 = smul.addr %s163, 8
      %s165 = scalar_lea.vmem %s3, %s164
      %v166 = vld [vmem:[%s161] sm:$0xff]
      %v167 = vld [vmem:[%s1] sm:$0xff]
      %v168 = vld [vmem:[%s1 + $0x8] sm:$0xff]
      %v169 = vld [vmem:[%s1 + $0x10] sm:$0xff]
      %v170 = vld [vmem:[%s1 + $0x18] sm:$0xff]
      %v171 = vld [vmem:[%s1 + $0x20] sm:$0xff]
      %v172 = vld [vmem:[%s1 + $0x28] sm:$0xff]
      %v173 = vld [vmem:[%s1 + $0x30] sm:$0xff]
      %v174 = vld [vmem:[%s1 + $0x38] sm:$0xff]
      %v175 = vld [vmem:[%s1 + $0x40] sm:$0xff]
      %v176 = vld [vmem:[%s1 + $0x48] sm:$0xff]
      %v177 = vld [vmem:[%s1 + $0x50] sm:$0xff]
      %v178 = vld [vmem:[%s1 + $0x58] sm:$0xff]
      %v179 = vld [vmem:[%s1 + $0x60] sm:$0xff]
      %v180 = vld [vmem:[%s1 + $0x68] sm:$0xff]
      %v181 = vld [vmem:[%s1 + $0x70] sm:$0xff]
      %v182 = vld [vmem:[%s1 + $0x78] sm:$0xff]
      %v183 = vld [vmem:[%s2] sm:$0x1]
      %v185 = vlaneseq
      %v186 = vshrl.u32 %v185, 7
      %v187 = vsub.s32 0, %v186
      %v188 = vrot.slane %v183, %v187
      %190 = vmatprep.subr.mxu0 0.0
      %191 = vmatpush1.msra.mxu0 %v182
      %192 = vmatprep.subr.mxu0 0.0
      %193 = vmatpush1.msra.mxu0 %v181
      %194 = vmatprep.subr.mxu0 0.0
      %195 = vmatpush1.msra.mxu0 %v180
      %196 = vmatprep.subr.mxu0 0.0
      %197 = vmatpush1.msra.mxu0 %v179
      %198 = vmatprep.subr.mxu0 0.0
      %199 = vmatpush1.msra.mxu0 %v178
      %200 = vmatprep.subr.mxu0 0.0
      %201 = vmatpush1.msra.mxu0 %v177
      %202 = vmatprep.subr.mxu0 0.0
      %203 = vmatpush1.msra.mxu0 %v176
      %204 = vmatprep.subr.mxu0 0.0
      %205 = vmatpush1.msra.mxu0 %v175
      %206 = vmatprep.subr.mxu0 0.0
      %207 = vmatpush1.msra.mxu0 %v174
      %208 = vmatprep.subr.mxu0 0.0
      %209 = vmatpush1.msra.mxu0 %v173
      %210 = vmatprep.subr.mxu0 0.0
      %211 = vmatpush1.msra.mxu0 %v172
      %212 = vmatprep.subr.mxu0 0.0
      %213 = vmatpush1.msra.mxu0 %v171
      %214 = vmatprep.subr.mxu0 0.0
      %215 = vmatpush1.msra.mxu0 %v170
      %216 = vmatprep.subr.mxu0 0.0
      %217 = vmatpush1.msra.mxu0 %v169
      %218 = vmatprep.subr.mxu0 0.0
      %219 = vmatpush1.msra.mxu0 %v168
      %220 = vmatprep.subr.mxu0 0.0
      %221 = vmatpush1.msra.mxu0 %v167
      %222 = vmatprep.subr.mxu0 0.0
      %223 = vmatpush2.msra.mxu0 0.0
      %224 = vmatprep.subr.mxu0 0.0
      %225 = vmatpush2.msra.mxu0 0.0
      %226 = vmatprep.subr.mxu0 0.0
      %227 = vmatpush2.msra.mxu0 0.0
      %228 = vmatprep.subr.mxu0 0.0
      %229 = vmatpush2.msra.mxu0 0.0
      %230 = vmatprep.subr.mxu0 0.0
      %231 = vmatpush2.msra.mxu0 0.0
      %232 = vmatprep.subr.mxu0 0.0
      %233 = vmatpush2.msra.mxu0 0.0
      %234 = vmatprep.subr.mxu0 0.0
      %235 = vmatpush2.msra.mxu0 0.0
      %236 = vmatprep.subr.mxu0 0.0
      %237 = vmatpush2.msra.mxu0 0.0
      %238 = vmatprep.subr.mxu0 0.0
      %239 = vmatpush2.msra.mxu0 0.0
      %240 = vmatprep.subr.mxu0 0.0
      %241 = vmatpush2.msra.mxu0 0.0
      %242 = vmatprep.subr.mxu0 0.0
      %243 = vmatpush2.msra.mxu0 0.0
      %244 = vmatprep.subr.mxu0 0.0
      %245 = vmatpush2.msra.mxu0 0.0
      %246 = vmatprep.subr.mxu0 0.0
      %247 = vmatpush2.msra.mxu0 0.0
      %248 = vmatprep.subr.mxu0 0.0
      %249 = vmatpush2.msra.mxu0 0.0
      %250 = vmatprep.subr.mxu0 0.0
      %251 = vmatpush2.msra.mxu0 0.0
      %252 = vmatprep.subr.mxu0 0.0
      %253 = vmatpush2.msra.mxu0 0.0
      %254 = vmatprep.mubr.f32.mxu0 0.0
      %255 = vmatmul.mubr.f32.gmra.mxu0 %v166
      %v256 = vpop.f32.mrf.mxu0
      %v257 = vadd.f32 %v188, %v256
      %v258 = vpop.f32.mrf.mxu0
      %259 = vdwg.mxu0
      %260 = vst [vmem:[%s165] sm:$0xff] %v257
      %p261 = scmp.lt.s32.totalorder %s14, 1
      %s262 = scalar_select %p261, %s14, 1
      %s263 = smul.addr %s262, 8
      %s264 = scalar_lea.vmem %s3, %s263
      // Predicated region
      $region33: #{single_conv2d_forward.1} parent=31 // pred_check
        %p265 = pneg %p100
      $region34: #{single_conv2d_forward.1} parent=31 // pred_check_branch
        %267 = sbr.rel (%p265) target = $region36
      $region35: #{single_conv2d_forward.1} parent=31 // pred_region
        _
      $region36: #{single_conv2d_forward.1} parent=31 // pred_fallthru
        _
    $region32: #{single_conv2d_forward.1} parent=5 // pred_fallthru
      _
    %p268 = scmp.le.s32.totalorder 2, %s9
    // Predicated region
    $region37: #{single_conv2d_forward.1} parent=5 // pred_check
      %p269 = pneg %p268
    $region38: #{single_conv2d_forward.1} parent=5 // pred_check_branch
      %271 = sbr.rel (%p269) target = $region40
    $region39: #{single_conv2d_forward.1} parent=5 // pred_region
      %s272 = ssub.s32 %s9, 2
      // Predicated region
      $region41: #{single_conv2d_forward.1} parent=39 // pred_check
        %p273 = pneg %p106
      $region42: #{single_conv2d_forward.1} parent=39 // pred_check_branch
        %275 = sbr.rel (%p273) target = $region44
      $region43: #{single_conv2d_forward.1} parent=39 // pred_region
        %p276 = scmp.lt.s32.totalorder %s15, 1
        %s277 = scalar_select %p276, %s15, 1
        %s278 = smul.addr %s277, 8
        %s279 = scalar_lea.vmem %s3, %s278
      $region44: #{single_conv2d_forward.1} parent=39 // pred_fallthru
        _
    $region40: #{single_conv2d_forward.1} parent=5 // pred_fallthru
      _
  $region6: #{single_conv2d_forward.1} parent=0 // loop_footer
    %s13 = sadd.s32 1, %s9
  $region7: #{single_conv2d_forward.1} parent=0 // loop_footer_branch
    %8 = sbr.rel target = $region3
  $region8: #{single_conv2d_forward.1} parent=0 // loop_exit
    _

</llo_original>
